<compile_context>
chip_gen: v5e
topology: v5e:2x2
jax: 0.10.0
libtpu: 0.0.40
codegen_flags: <defaults>
</compile_context>

<pallas_src>
import jax
import jax.numpy as jnp
from jax.experimental import pallas as pl
from jax.experimental.pallas import tpu as pltpu


def _round_up(x, m):
    return ((x + m - 1) // m) * m


def _cdiv(a, b):
    return (a + b - 1) // b


def _vmem_capacity_bytes():
    """Physical per-core VMEM (generation-aware); conservative fallback."""
    try:
        cap = getattr(pltpu.get_tpu_info(), "vmem_capacity_bytes", None)
        if cap:
            return int(cap)
    except Exception:
        pass
    return 64 * 1024 * 1024  # v7x per-TensorCore figure (most restrictive)


def lora_kernel(alpha_ref, x_ref, a_ref, b_ref, o_ref):
    # alpha_ref: (1,) f32 in SMEM
    # x_ref: (TM, in_dim)  a_ref: (in_dim, rank_p)  b_ref: (rank_p, out_dim)
    # First matmul in the input dtype, f32 accumulation on the MXU.
    xa = jnp.dot(x_ref[...], a_ref[...], preferred_element_type=jnp.float32)
    # Fold alpha into the small (TM, rank_p) intermediate (out_dim/rank_p
    # cheaper than scaling the output), then drop to the weight dtype so the
    # second matmul runs at bf16 MXU rate when inputs are bf16 (no-op for f32).
    xa = (alpha_ref[0] * xa).astype(b_ref.dtype)
    y = jnp.dot(xa, b_ref[...], preferred_element_type=jnp.float32)
    o_ref[...] = y.astype(o_ref.dtype)


def lora_forward(x, A, B, alpha):
    """Returns alpha * (x @ A @ B); x: (..., in_dim)."""
    orig_shape = x.shape
    in_dim, rank = A.shape
    rank_b, out_dim = B.shape
    assert rank_b == rank and orig_shape[-1] == in_dim

    x2d = x.reshape(-1, in_dim)
    M = x2d.shape[0]
    dtype = x2d.dtype
    itemsize = jnp.dtype(dtype).itemsize
    sublane = max(8, 32 // itemsize)          # 8 f32, 16 bf16, 32 int8/fp8

    # Zero-pad only the rank axis to a lane-dense 128 (exact math).  out_dim is
    # written at its true extent: a full-extent last dim is a legal block shape
    # and avoids a pad-then-slice extra HBM pass over the output.
    rank_p = _round_up(rank, 128)
    A_p = jnp.pad(A.astype(dtype), ((0, 0), (0, rank_p - rank)))
    B_p = jnp.pad(B.astype(dtype), ((0, rank_p - rank), (0, 0)))

    # ---- generation-aware tile sizing -------------------------------------
    vmem_cap = _vmem_capacity_bytes()
    big_vmem = vmem_cap >= 96 * 1024 * 1024   # v5e/v6e: 128 MiB; v7x: 64 MiB/TC
    x_bufs = 3 if big_vmem else 2             # deeper x pipeline on v5e/v6e

    ab_bytes = (in_dim * rank_p + rank_p * out_dim) * itemsize
    budget = int(vmem_cap * (0.70 if big_vmem else 0.55))
    avail = max(budget - 2 * ab_bytes, 1 << 20)
    # per-M-row VMEM: streamed x buffers, double-buffered y, f32 xa + cast xa.
    per_row = (x_bufs * in_dim + 2 * out_dim) * itemsize + rank_p * (4 + itemsize)
    raw = max(avail // per_row, sublane)
    cap = 2048 if big_vmem else 1024
    TM = max(sublane, min(cap, (raw // sublane) * sublane))
    # Give the "parallel" M axis >= 2 grid steps when M allows, so both v7x
    # TensorCores get work (neutral on single-TC chips).
    TM = max(sublane, min(TM, _round_up(_cdiv(M, 2), sublane)))
    grid_m = _cdiv(M, TM)

    alpha_arr = jnp.asarray(alpha, dtype=jnp.float32).reshape(1)

    cost = pl.CostEstimate(
        flops=int(2 * M * in_dim * rank_p + 2 * M * rank_p * out_dim),
        transcendentals=0,
        bytes_accessed=int(itemsize * (M * in_dim + M * out_dim
                                       + in_dim * rank_p + rank_p * out_dim)),
    )
    compiler_params = pltpu.CompilerParams(
        dimension_semantics=("parallel",),
        vmem_limit_bytes=min(int(vmem_cap * 0.8), 112 * 1024 * 1024),
    )

    def build(use_buffer_hints):
        if use_buffer_hints:
            # A / B are grid-invariant -> single buffer; x gets the deeper pipe.
            x_spec = pl.BlockSpec((TM, in_dim), lambda i: (i, 0),
                                  pipeline_mode=pl.Buffered(x_bufs))
            a_spec = pl.BlockSpec((in_dim, rank_p), lambda i: (0, 0),
                                  pipeline_mode=pl.Buffered(1))
            b_spec = pl.BlockSpec((rank_p, out_dim), lambda i: (0, 0),
                                  pipeline_mode=pl.Buffered(1))
        else:
            x_spec = pl.BlockSpec((TM, in_dim), lambda i: (i, 0))
            a_spec = pl.BlockSpec((in_dim, rank_p), lambda i: (0, 0))
            b_spec = pl.BlockSpec((rank_p, out_dim), lambda i: (0, 0))
        return pl.pallas_call(
            lora_kernel,
            out_shape=jax.ShapeDtypeStruct((M, out_dim), dtype),
            grid_spec=pltpu.PrefetchScalarGridSpec(
                num_scalar_prefetch=0,
                grid=(grid_m,),
                in_specs=[
                    pl.BlockSpec(memory_space=pltpu.MemorySpace.SMEM),  # alpha
                    x_spec,   # x tile   (streamed)
                    a_spec,   # A        (resident)
                    b_spec,   # B        (resident)
                ],
                out_specs=pl.BlockSpec((TM, out_dim), lambda i: (i, 0)),
            ),
            compiler_params=compiler_params,
            cost_estimate=cost,
        )

    try:
        y2d = build(True)(alpha_arr, x2d, A_p, B_p)
    except Exception:
        # Older jax versions may reject pipeline_mode hints; semantics identical.
        y2d = build(False)(alpha_arr, x2d, A_p, B_p)

    return y2d.reshape(*orig_shape[:-1], out_dim)


if __name__ == "__main__":
    # Small shapes consistent with the module's forward: x @ A @ B
    batch, seq, in_dim, out_dim, rank = 2, 8, 32, 32, 4
    alpha = 2.0

    key = jax.random.PRNGKey(0)
    kx, ka, kb = jax.random.split(key, 3)

    x = jax.random.normal(kx, (batch, seq, in_dim), dtype=jnp.float32)

    # Deterministic parameter init matching LoRALayer.__init__:
    std_dev = 1.0 / jnp.sqrt(jnp.float32(rank))
    A = jax.random.normal(ka, (in_dim, rank), dtype=jnp.float32) * std_dev
    B0 = jnp.zeros((rank, out_dim), dtype=jnp.float32)

    # 1) Fresh-init LoRA (B == 0  ->  output exactly 0).
    y0 = jax.block_until_ready(lora_forward(x, A, B0, alpha))
    assert y0.shape == (batch, seq, out_dim)
    assert jnp.allclose(y0, alpha * (x @ A @ B0), atol=1e-5, rtol=1e-5)

    # 2) Non-zero B (as after training) to exercise the full double matmul.
    B1 = jax.random.normal(kb, (rank, out_dim), dtype=jnp.float32) * 0.1
    y1 = jax.block_until_ready(lora_forward(x, A, B1, alpha))
    assert jnp.allclose(y1, alpha * (x @ A @ B1), atol=1e-4, rtol=1e-4)

    print("KERNEL_OK")
</pallas_src>

<mosaic_0001>
module attributes {stable_mosaic.version = 11 : i64} {
  func.func @lora_kernel(%arg0: i32, %arg1: memref<1xf32, #tpu.memory_space<smem>>, %arg2: memref<8x32xf32, #tpu.memory_space<vmem>>, %arg3: memref<32x128xf32, #tpu.memory_space<vmem>>, %arg4: memref<128x32xf32, #tpu.memory_space<vmem>>, %arg5: memref<8x32xf32, #tpu.memory_space<vmem>>) attributes {dimension_semantics = [#tpu.dimension_semantics<parallel>], iteration_bounds = array<i64: 2>, scalar_prefetch = 0 : i64, scratch_operands = 0 : i64, tpu.core_type = #tpu.core_type<tc>, window_params = [{transform_indices = @transform_0, window_bounds = array<i64: 1>}, {pipeline_mode = #tpu.pipeline_mode<double_buffered>, transform_indices = @transform_1, window_bounds = array<i64: 8, 32>}, {pipeline_mode = #tpu.pipeline_mode<synchronous>, transform_indices = @transform_2, window_bounds = array<i64: 32, 128>}, {pipeline_mode = #tpu.pipeline_mode<synchronous>, transform_indices = @transform_3, window_bounds = array<i64: 128, 32>}, {transform_indices = @transform_4, window_bounds = array<i64: 8, 32>}]} {
    %c0 = arith.constant 0 : index
    %c0_0 = arith.constant 0 : index
    %0 = vector.load %arg2[%c0, %c0_0] : memref<8x32xf32, #tpu.memory_space<vmem>>, vector<8x32xf32>
    %c0_1 = arith.constant 0 : index
    %c0_2 = arith.constant 0 : index
    %1 = vector.load %arg3[%c0_1, %c0_2] : memref<32x128xf32, #tpu.memory_space<vmem>>, vector<32x128xf32>
    %cst = arith.constant dense<0.000000e+00> : vector<8x128xf32>
    %2 = tpu.matmul %0, %1, %cst {dimension_numbers = #tpu.dot_dimension_numbers<[1], [0], [0], [1], [0, 0, 1, 1], [], []>} : vector<8x32xf32>, vector<32x128xf32>, vector<8x128xf32> -> vector<8x128xf32>
    %c0_3 = arith.constant 0 : index
    %3 = memref.load %arg1[%c0_3] : memref<1xf32, #tpu.memory_space<smem>>
    %4 = vector.broadcast %3 : f32 to vector<8x128xf32>
    %5 = arith.mulf %4, %2 : vector<8x128xf32>
    %c0_4 = arith.constant 0 : index
    %c0_5 = arith.constant 0 : index
    %6 = vector.load %arg4[%c0_4, %c0_5] : memref<128x32xf32, #tpu.memory_space<vmem>>, vector<128x32xf32>
    %cst_6 = arith.constant dense<0.000000e+00> : vector<8x32xf32>
    %7 = tpu.matmul %5, %6, %cst_6 {dimension_numbers = #tpu.dot_dimension_numbers<[1], [0], [0], [1], [0, 0, 1, 1], [], []>} : vector<8x128xf32>, vector<128x32xf32>, vector<8x32xf32> -> vector<8x32xf32>
    %c0_7 = arith.constant 0 : index
    %c0_8 = arith.constant 0 : index
    %8 = vector.load %arg5[%c0_7, %c0_8] : memref<8x32xf32, #tpu.memory_space<vmem>>, vector<8x32xf32>
    tpu.vector_store %arg5[%c0_7, %c0_8], %7 {strides = array<i32>} : memref<8x32xf32, #tpu.memory_space<vmem>>, vector<8x32xf32>,
    return
  }
  func.func @transform_0(%arg0: i32) -> i32 {
    %c0_i32 = arith.constant 0 : i32
    %c0_i32_0 = arith.constant 0 : i32
    return %c0_i32 : i32
  }
  func.func @transform_1(%arg0: i32) -> (i32, i32) {
    %c0_i32 = arith.constant 0 : i32
    %c0_i32_0 = arith.constant 0 : i32
    return %arg0, %c0_i32 : i32, i32
  }
  func.func @transform_2(%arg0: i32) -> (i32, i32) {
    %c0_i32 = arith.constant 0 : i32
    %c0_i32_0 = arith.constant 0 : i32
    %c0_i32_1 = arith.constant 0 : i32
    return %c0_i32, %c0_i32_0 : i32, i32
  }
  func.func @transform_3(%arg0: i32) -> (i32, i32) {
    %c0_i32 = arith.constant 0 : i32
    %c0_i32_0 = arith.constant 0 : i32
    %c0_i32_1 = arith.constant 0 : i32
    return %c0_i32, %c0_i32_0 : i32, i32
  }
  func.func @transform_4(%arg0: i32) -> (i32, i32) {
    %c0_i32 = arith.constant 0 : i32
    %c0_i32_0 = arith.constant 0 : i32
    return %arg0, %c0_i32 : i32, i32
  }
}

module attributes {stable_mosaic.version = 11 : i64} {
  func.func @lora_kernel(%arg0: i32, %arg1: memref<1xf32, #tpu.memory_space<smem>>, %arg2: memref<8x32xf32, #tpu.memory_space<vmem>>, %arg3: memref<32x128xf32, #tpu.memory_space<vmem>>, %arg4: memref<128x32xf32, #tpu.memory_space<vmem>>, %arg5: memref<8x32xf32, #tpu.memory_space<vmem>>) attributes {dimension_semantics = [#tpu.dimension_semantics<parallel>], iteration_bounds = array<i64: 2>, scalar_prefetch = 0 : i64, scratch_operands = 0 : i64, tpu.core_type = #tpu.core_type<tc>, window_params = [{transform_indices = @transform_0, window_bounds = array<i64: 1>}, {transform_indices = @transform_1, window_bounds = array<i64: 8, 32>}, {pipeline_mode = #tpu.pipeline_mode<synchronous>, transform_indices = @transform_2, window_bounds = array<i64: 32, 128>}, {pipeline_mode = #tpu.pipeline_mode<synchronous>, transform_indices = @transform_3, window_bounds = array<i64: 128, 32>}, {transform_indices = @transform_4, window_bounds = array<i64: 8, 32>}]} {
    %c0 = arith.constant 0 : index
    %c0_0 = arith.constant 0 : index
    %0 = vector.load %arg2[%c0, %c0_0] : memref<8x32xf32, #tpu.memory_space<vmem>>, vector<8x32xf32>
    %c0_1 = arith.constant 0 : index
    %c0_2 = arith.constant 0 : index
    %1 = vector.load %arg3[%c0_1, %c0_2] : memref<32x128xf32, #tpu.memory_space<vmem>>, vector<32x128xf32>
    %cst = arith.constant dense<0.000000e+00> : vector<8x128xf32>
    %2 = tpu.matmul %0, %1, %cst {dimension_numbers = #tpu.dot_dimension_numbers<[1], [0], [0], [1], [0, 0, 1, 1], [], []>} : vector<8x32xf32>, vector<32x128xf32>, vector<8x128xf32> -> vector<8x128xf32>
    %c0_3 = arith.constant 0 : index
    %3 = memref.load %arg1[%c0_3] : memref<1xf32, #tpu.memory_space<smem>>
    %4 = vector.broadcast %3 : f32 to vector<8x128xf32>
    %5 = arith.mulf %4, %2 : vector<8x128xf32>
    %c0_4 = arith.constant 0 : index
    %c0_5 = arith.constant 0 : index
    %6 = vector.load %arg4[%c0_4, %c0_5] : memref<128x32xf32, #tpu.memory_space<vmem>>, vector<128x32xf32>
    %cst_6 = arith.constant dense<0.000000e+00> : vector<8x32xf32>
    %7 = tpu.matmul %5, %6, %cst_6 {dimension_numbers = #tpu.dot_dimension_numbers<[1], [0], [0], [1], [0, 0, 1, 1], [], []>} : vector<8x128xf32>, vector<128x32xf32>, vector<8x32xf32> -> vector<8x32xf32>
    %c0_7 = arith.constant 0 : index
    %c0_8 = arith.constant 0 : index
    %8 = vector.load %arg5[%c0_7, %c0_8] : memref<8x32xf32, #tpu.memory_space<vmem>>, vector<8x32xf32>
    tpu.vector_store %arg5[%c0_7, %c0_8], %7 {strides = array<i32>} : memref<8x32xf32, #tpu.memory_space<vmem>>, vector<8x32xf32>,
    return
  }
  func.func @transform_0(%arg0: i32) -> i32 {
    %c0_i32 = arith.constant 0 : i32
    %c0_i32_0 = arith.constant 0 : i32
    return %c0_i32 : i32
  }
  func.func @transform_1(%arg0: i32) -> (i32, i32) {
    %c0_i32 = arith.constant 0 : i32
    %c0_i32_0 = arith.constant 0 : i32
    return %arg0, %c0_i32 : i32, i32
  }
  func.func @transform_2(%arg0: i32) -> (i32, i32) {
    %c0_i32 = arith.constant 0 : i32
    %c0_i32_0 = arith.constant 0 : i32
    %c0_i32_1 = arith.constant 0 : i32
    return %c0_i32, %c0_i32_0 : i32, i32
  }
  func.func @transform_3(%arg0: i32) -> (i32, i32) {
    %c0_i32 = arith.constant 0 : i32
    %c0_i32_0 = arith.constant 0 : i32
    %c0_i32_1 = arith.constant 0 : i32
    return %c0_i32, %c0_i32_0 : i32, i32
  }
  func.func @transform_4(%arg0: i32) -> (i32, i32) {
    %c0_i32 = arith.constant 0 : i32
    %c0_i32_0 = arith.constant 0 : i32
    return %arg0, %c0_i32 : i32, i32
  }
}

</mosaic_0001>

<llo_original>
// kernel: tpu_custom_call.1
$region0: #{tpu_custom_call.1}
  #allocation0 [shape = 'u32[]', space=smem, size = 0x4, offset = 0x4, fixed_abs, tag = 'smem constant byte address 0x4 - core index']
  #allocation1 [shape = 'u32[72,128]{1,0:T(1,128)}', space=vmem, size = 0x9000, scoped, tag = 'internal scratch']
  #allocation2 [shape = 'f32[1]{0:T(128)S(6)}', space=smem, size = 0x200, scoped, tag = 'scoped memory for tpu_custom_call.1']
  %s0 = inlined_call_operand.<no memory space> [shape: f32[1], index: 0, kind: input, shape index: {}]
  %s1 = inlined_call_operand.vmem [shape: f32[16,32], index: 1, kind: input, shape index: {}]
  %s2 = inlined_call_operand.vmem [shape: f32[32,128], index: 2, kind: input, shape index: {}]
  %s3 = inlined_call_operand.vmem [shape: f32[128,32], index: 3, kind: input, shape index: {}]
  %s4 = inlined_call_operand.hbm [shape: f32[16,32], index: 4, kind: output, shape index: {}]
  %s5 = sld [smem:[#allocation0]]
  $region49: #{tpu_custom_call.1} parent=0
    _
  %s7 = ssub.s32 1, %s5
  %s8 = scalar_select 0, %s7, %s5
  %9 = sst [smem:[#allocation2]] %s0
  $region1: #{tpu_custom_call.1} parent=0
    #allocation3 [shape = 'u8[8192]{0}', space=vmem, size = 0x2000, scoped, tag = 'output window, operand 0']
    #allocation4 [shape = 's32[2]{0}', space=sflag, size = 0x8, scoped, tag = 'scoped memory for tpu_custom_call.1']
    %10 = vsyncpa [#allocation4], 0
    %s11 = scalar_lea.sflag [#allocation4], 1
    %12 = vsyncpa %s11, 0
    loop: start=0, step=1, limit=4
    $region2: #{tpu_custom_call.1} parent=1 // loop_pre_header
      _
    $region3: #{tpu_custom_call.1} parent=1 // loop_header
      %s14 = sphi 0, %s18
      %p15 = scmp.ge.s32.totalorder %s14, 4
      %s22 = sphi 0, %s22
      %s24 = sphi 0, %s22
      %s25 = sphi 0, %s24
      %s39 = sphi 0, %s25
      %s45 = sphi 0, %s47
      %s48 = sphi 0, %s45
      %s49 = sphi 0, %s48
      %s65 = sphi 0, %s49
      %s69 = sphi 0, %s69
      %s71 = sphi 0, %s69
      %s72 = sphi 0, %s71
      %s86 = sphi 0, %s72
      %s90 = sphi 0, %s90
      %s92 = sphi 0, %s90
      %s93 = sphi 0, %s92
      %s107 = sphi 0, %s93
      %s113 = sphi 0, %s115
      %s116 = sphi 0, %s113
      %s117 = sphi 0, %s116
      %s133 = sphi 0, %s117
    $region4: #{tpu_custom_call.1} parent=1 // loop_header_branch
      %17 = sbr.rel (%p15) target = $region8
    $region5: #{tpu_custom_call.1} parent=1 // loop_body
      %s19 = ssub.s32 %s14, 1
      %s20 = ssub.s32 %s14, 2
      %s21 = sadd.s32 %s14, 1
      %s23 = sadd.s32 %s22, 1
      %p26 = scmp.eq.s32.totalorder %s14, 1
      %p27 = scmp.ne.s32.totalorder %s22, %s24
      %p28 = scmp.eq.s32.totalorder %s14, 0
      %p29 = por %p27, %p28
      %p30 = scmp.ne.s32.totalorder %s22, %s24
      %p31 = scmp.eq.s32.totalorder %s19, 1
      %p32 = por %p30, %p31
      %p33 = scmp.ne.s32.totalorder %s24, %s25
      %p34 = scmp.eq.s32.totalorder %s19, 0
      %p35 = por %p33, %p34
      %p36 = scmp.ne.s32.totalorder %s24, %s25
      %p37 = scmp.eq.s32.totalorder %s20, 1
      %p38 = por %p36, %p37
      %p40 = scmp.ne.s32.totalorder %s25, %s39
      %p41 = scmp.eq.s32.totalorder %s20, 0
      %p42 = por %p40, %p41
      %s43 = ssub.s32 %s14, %s21
      %p44 = scmp.eq.s32.totalorder %s43, 0
      %s46 = sadd.s32 %s45, 1
      %s47 = scalar_select %p44, %s45, %s46
      %p50 = pneg %p44
      %p51 = scmp.eq.s32.totalorder %s14, 1
      %p52 = por %p50, %p51
      %p53 = scmp.ne.s32.totalorder %s45, %s48
      %p54 = scmp.eq.s32.totalorder %s14, 0
      %p55 = por %p53, %p54
      %p56 = scmp.ne.s32.totalorder %s45, %s48
      %p57 = scmp.eq.s32.totalorder %s19, 1
      %p58 = por %p56, %p57
      %p59 = scmp.ne.s32.totalorder %s48, %s49
      %p60 = scmp.eq.s32.totalorder %s19, 0
      %p61 = por %p59, %p60
      %p62 = scmp.ne.s32.totalorder %s48, %s49
      %p63 = scmp.eq.s32.totalorder %s20, 1
      %p64 = por %p62, %p63
      %p66 = scmp.ne.s32.totalorder %s49, %s65
      %p67 = scmp.eq.s32.totalorder %s20, 0
      %p68 = por %p66, %p67
      %s70 = sadd.s32 %s69, 1
      %p73 = scmp.eq.s32.totalorder %s14, 1
      %p74 = scmp.ne.s32.totalorder %s69, %s71
      %p75 = scmp.eq.s32.totalorder %s14, 0
      %p76 = por %p74, %p75
      %p77 = scmp.ne.s32.totalorder %s69, %s71
      %p78 = scmp.eq.s32.totalorder %s19, 1
      %p79 = por %p77, %p78
      %p80 = scmp.ne.s32.totalorder %s71, %s72
      %p81 = scmp.eq.s32.totalorder %s19, 0
      %p82 = por %p80, %p81
      %p83 = scmp.ne.s32.totalorder %s71, %s72
      %p84 = scmp.eq.s32.totalorder %s20, 1
      %p85 = por %p83, %p84
      %p87 = scmp.ne.s32.totalorder %s72, %s86
      %p88 = scmp.eq.s32.totalorder %s20, 0
      %p89 = por %p87, %p88
      %s91 = sadd.s32 %s90, 1
      %p94 = scmp.eq.s32.totalorder %s14, 1
      %p95 = scmp.ne.s32.totalorder %s90, %s92
      %p96 = scmp.eq.s32.totalorder %s14, 0
      %p97 = por %p95, %p96
      %p98 = scmp.ne.s32.totalorder %s90, %s92
      %p99 = scmp.eq.s32.totalorder %s19, 1
      %p100 = por %p98, %p99
      %p101 = scmp.ne.s32.totalorder %s92, %s93
      %p102 = scmp.eq.s32.totalorder %s19, 0
      %p103 = por %p101, %p102
      %p104 = scmp.ne.s32.totalorder %s92, %s93
      %p105 = scmp.eq.s32.totalorder %s20, 1
      %p106 = por %p104, %p105
      %p108 = scmp.ne.s32.totalorder %s93, %s107
      %p109 = scmp.eq.s32.totalorder %s20, 0
      %p110 = por %p108, %p109
      %s111 = ssub.s32 %s14, %s21
      %p112 = scmp.eq.s32.totalorder %s111, 0
      %s114 = sadd.s32 %s113, 1
      %s115 = scalar_select %p112, %s113, %s114
      %p118 = pneg %p112
      %p119 = scmp.eq.s32.totalorder %s14, 1
      %p120 = por %p118, %p119
      %p121 = scmp.ne.s32.totalorder %s113, %s116
      %p122 = scmp.eq.s32.totalorder %s14, 0
      %p123 = por %p121, %p122
      %p124 = scmp.ne.s32.totalorder %s113, %s116
      %p125 = scmp.eq.s32.totalorder %s19, 1
      %p126 = por %p124, %p125
      %p127 = scmp.ne.s32.totalorder %s116, %s117
      %p128 = scmp.eq.s32.totalorder %s19, 0
      %p129 = por %p127, %p128
      %p130 = scmp.ne.s32.totalorder %s116, %s117
      %p131 = scmp.eq.s32.totalorder %s20, 1
      %p132 = por %p130, %p131
      %p134 = scmp.ne.s32.totalorder %s117, %s133
      %p135 = scmp.eq.s32.totalorder %s20, 0
      %p136 = por %p134, %p135
      %p137 = scmp.le.s32.totalorder 1, %s14
      %p138 = scmp.lt.s32.totalorder %s14, 3
      %p139 = pnand %p137, %p138
      %p140 = pneg %p139
      // Predicated region
      $region9: #{tpu_custom_call.1} parent=5 // pred_check
        _
      $region10: #{tpu_custom_call.1} parent=5 // pred_check_branch
        %142 = sbr.rel (%p139) target = $region12
      $region11: #{tpu_custom_call.1} parent=5 // pred_region
        %s143 = ssub.s32 %s14, 1
        // Predicated region
        $region13: #{tpu_custom_call.1} parent=11 // pred_check
          %p144 = pneg %p35
        $region14: #{tpu_custom_call.1} parent=11 // pred_check_branch
          %146 = sbr.rel (%p144) target = $region16
        $region15: #{tpu_custom_call.1} parent=11 // pred_region
          _
        $region16: #{tpu_custom_call.1} parent=11 // pred_fallthru
          _
        // Predicated region
        $region17: #{tpu_custom_call.1} parent=11 // pred_check
          %p147 = pneg %p82
        $region18: #{tpu_custom_call.1} parent=11 // pred_check_branch
          %149 = sbr.rel (%p147) target = $region20
        $region19: #{tpu_custom_call.1} parent=11 // pred_region
          _
        $region20: #{tpu_custom_call.1} parent=11 // pred_fallthru
          _
        // Predicated region
        $region21: #{tpu_custom_call.1} parent=11 // pred_check
          %p150 = pneg %p103
        $region22: #{tpu_custom_call.1} parent=11 // pred_check_branch
          %152 = sbr.rel (%p150) target = $region24
        $region23: #{tpu_custom_call.1} parent=11 // pred_region
          _
        $region24: #{tpu_custom_call.1} parent=11 // pred_fallthru
          _
      $region12: #{tpu_custom_call.1} parent=5 // pred_fallthru
        _
      %p153 = scmp.lt.s32.totalorder %s14, 2
      // Predicated region
      $region25: #{tpu_custom_call.1} parent=5 // pred_check
        %p154 = pneg %p153
      $region26: #{tpu_custom_call.1} parent=5 // pred_check_branch
        %156 = sbr.rel (%p154) target = $region28
      $region27: #{tpu_custom_call.1} parent=5 // pred_region
        // Predicated region
        $region29: #{tpu_custom_call.1} parent=27 // pred_check
          %p157 = pneg %p55
        $region30: #{tpu_custom_call.1} parent=27 // pred_check_branch
          %159 = sbr.rel (%p157) target = $region32
        $region31: #{tpu_custom_call.1} parent=27 // pred_region
          %p160 = scmp.lt.s32.totalorder %s14, 1
          %s161 = scalar_select %p160, %s14, 1
          %s162 = smul.addr %s161, 8
          %s163 = scalar_lea.vmem %s1, %s162
        $region32: #{tpu_custom_call.1} parent=27 // pred_fallthru
          _
      $region28: #{tpu_custom_call.1} parent=5 // pred_fallthru
        _
      %p164 = scmp.le.s32.totalorder 1, %s14
      %p165 = scmp.lt.s32.totalorder %s14, 3
      %p166 = pnand %p164, %p165
      %p167 = pneg %p166
      // Predicated region
      $region33: #{tpu_custom_call.1} parent=5 // pred_check
        _
      $region34: #{tpu_custom_call.1} parent=5 // pred_check_branch
        %169 = sbr.rel (%p166) target = $region36
      $region35: #{tpu_custom_call.1} parent=5 // pred_region
        %s170 = ssub.s32 %s14, 1
        %p171 = pneg %p35
        %p172 = pneg %p32
        %p173 = scmp.lt.s32.totalorder %s19, 1
        %s174 = scalar_select %p173, %s19, 1
        %s175 = smul.addr %s174, 8
        %s176 = scalar_lea.vmem %s1, %s175
        %p177 = pneg %p61
        %p178 = pneg %p58
        %p179 = pneg %p82
        %p180 = pneg %p79
        %p181 = pneg %p103
        %p182 = pneg %p100
        %p183 = pneg %p129
        %p184 = pneg %p126
        %s185 = sand.u32 %s116, 1
        %s186 = scalar_lea.sflag [#allocation4], %s185
        %s187 = sand.u32 %s116, 1
        %s188 = smul.addr %s187, 8
        %s189 = scalar_lea.vmem [#allocation3], %s188
        %p190 = scmp.lt.s32.totalorder %s19, 1
        %s191 = scalar_select %p190, %s19, 1
        %s192 = smul.addr %s191, 8
        %s193 = scalar_lea.vmem %s1, %s192
        %v194 = vld [vmem:[%s193] sm:$0xff]
        %v195 = vld [vmem:[%s2] sm:$0xff]
        %v196 = vld [vmem:[%s2 + $0x8] sm:$0xff]
        %v197 = vld [vmem:[%s2 + $0x10] sm:$0xff]
        %v198 = vld [vmem:[%s2 + $0x18] sm:$0xff]
        %vm199 = vcmask 261120
        %v201 = vsel %vm199, %v194, 0
        %203 = vmatpush.msra.mxu0 0.0
        %204 = vmatpush.msra.mxu0 0.0
        %205 = vmatpush.msra.mxu0 0.0
        %206 = vmatpush.msra.mxu0 0.0
        %207 = vmatpush.msra.mxu0 0.0
        %208 = vmatpush.msra.mxu0 0.0
        %209 = vmatpush.msra.mxu0 0.0
        %210 = vmatpush.msra.mxu0 0.0
        %211 = vmatpush.msra.mxu0 0.0
        %212 = vmatpush.msra.mxu0 0.0
        %213 = vmatpush.msra.mxu0 0.0
        %214 = vmatpush.msra.mxu0 0.0
        %215 = vmatpush.msra.mxu0 %v198
        %216 = vmatpush.msra.mxu0 %v197
        %217 = vmatpush.msra.mxu0 %v196
        %218 = vmatpush.msra.mxu0 %v195
        %219 = vmatmul.f32.gmra.mxu0 %v201
        %v220 = vpop.f32.mrf.mxu0
        %v221 = vadd.f32 0.0, %v220
        %222 = vdwg.mxu0
        %s223 = sld [smem:[#allocation2]]
        %v224 = vstv %s223
        %v225 = vmul.f32 %v224, %v221
        %v226 = vld [vmem:[%s3] sm:$0xff]
        %v227 = vld [vmem:[%s3 + $0x8] sm:$0xff]
        %v228 = vld [vmem:[%s3 + $0x10] sm:$0xff]
        %v229 = vld [vmem:[%s3 + $0x18] sm:$0xff]
        %v230 = vld [vmem:[%s3 + $0x20] sm:$0xff]
        %v231 = vld [vmem:[%s3 + $0x28] sm:$0xff]
        %v232 = vld [vmem:[%s3 + $0x30] sm:$0xff]
        %v233 = vld [vmem:[%s3 + $0x38] sm:$0xff]
        %v234 = vld [vmem:[%s3 + $0x40] sm:$0xff]
        %v235 = vld [vmem:[%s3 + $0x48] sm:$0xff]
        %v236 = vld [vmem:[%s3 + $0x50] sm:$0xff]
        %v237 = vld [vmem:[%s3 + $0x58] sm:$0xff]
        %v238 = vld [vmem:[%s3 + $0x60] sm:$0xff]
        %v239 = vld [vmem:[%s3 + $0x68] sm:$0xff]
        %v240 = vld [vmem:[%s3 + $0x70] sm:$0xff]
        %v241 = vld [vmem:[%s3 + $0x78] sm:$0xff]
        %242 = vmatpush.msra.mxu0 %v241
        %243 = vmatpush.msra.mxu0 %v240
        %244 = vmatpush.msra.mxu0 %v239
        %245 = vmatpush.msra.mxu0 %v238
        %246 = vmatpush.msra.mxu0 %v237
        %247 = vmatpush.msra.mxu0 %v236
        %248 = vmatpush.msra.mxu0 %v235
        %249 = vmatpush.msra.mxu0 %v234
        %250 = vmatpush.msra.mxu0 %v233
        %251 = vmatpush.msra.mxu0 %v232
        %252 = vmatpush.msra.mxu0 %v231
        %253 = vmatpush.msra.mxu0 %v230
        %254 = vmatpush.msra.mxu0 %v229
        %255 = vmatpush.msra.mxu0 %v228
        %256 = vmatpush.msra.mxu0 %v227
        %257 = vmatpush.msra.mxu0 %v226
        %258 = vmatmul.f32.gmra.mxu0 %v225
        %v259 = vpop.f32.mrf.mxu0
        %v260 = vadd.f32 0.0, %v259
        %261 = vdwg.mxu0
        %262 = vst.msk [vmem:[%s189] sm:$0xff] %vm199, %v260
        %s263 = sand.u32 %s116, 1
        %s264 = scalar_lea.sflag [#allocation4], %s263
        %s265 = sand.u32 %s116, 1
        %s266 = smul.addr %s265, 8
        %s267 = scalar_lea.vmem [#allocation3], %s266
        // Predicated region
        $region37: #{tpu_custom_call.1} parent=35 // pred_check
          %p268 = pneg %p126
        $region38: #{tpu_custom_call.1} parent=35 // pred_check_branch
          %270 = sbr.rel (%p268) target = $region40
        $region39: #{tpu_custom_call.1} parent=35 // pred_region
          %272 = vsyncadd %s264, 0
          %s273 = smul.addr %s19, 8
          %s274 = scalar_lea.hbm %s4, %s273
          %s276 = sshll.u32 %s267, 4
          %s277 = int_to_ptr.vmem [resolvable:$true] %s276
          %s278 = sshll.u32 %s274, 4
          %s279 = int_to_ptr.hbm [resolvable:$true] %s278
          %281 = dma.vmem_to_hbm [thread:$0]  %s277, 128, %s279, %s264
        $region40: #{tpu_custom_call.1} parent=35 // pred_fallthru
          _
      $region36: #{tpu_custom_call.1} parent=5 // pred_fallthru
        _
      %p282 = scmp.le.s32.totalorder 2, %s14
      // Predicated region
      $region41: #{tpu_custom_call.1} parent=5 // pred_check
        %p283 = pneg %p282
      $region42: #{tpu_custom_call.1} parent=5 // pred_check_branch
        %285 = sbr.rel (%p283) target = $region44
      $region43: #{tpu_custom_call.1} parent=5 // pred_region
        %s286 = ssub.s32 %s14, 2
        // Predicated region
        $region45: #{tpu_custom_call.1} parent=43 // pred_check
          %p287 = pneg %p132
        $region46: #{tpu_custom_call.1} parent=43 // pred_check_branch
          %289 = sbr.rel (%p287) target = $region48
        $region47: #{tpu_custom_call.1} parent=43 // pred_region
          %s290 = sand.u32 %s117, 1
          %s291 = scalar_lea.sflag [#allocation4], %s290
          %s292 = sand.u32 %s117, 1
          %s293 = smul.addr %s292, 8
          %s294 = scalar_lea.vmem [#allocation3], %s293
          %296 = dma.done %s291, 128
        $region48: #{tpu_custom_call.1} parent=43 // pred_fallthru
          _
      $region44: #{tpu_custom_call.1} parent=5 // pred_fallthru
        _
    $region6: #{tpu_custom_call.1} parent=1 // loop_footer
      %s18 = sadd.s32 1, %s14
    $region7: #{tpu_custom_call.1} parent=1 // loop_footer_branch
      %13 = sbr.rel target = $region3
    $region8: #{tpu_custom_call.1} parent=1 // loop_exit
      _
    %297 = vsyncpa [#allocation4], 1
    %s298 = scalar_lea.sflag [#allocation4], 1
    %299 = vsyncpa %s298, 1

// kernel: tpu_custom_call.1
$region0: #{tpu_custom_call.1}
  #allocation0 [shape = 'u32[]', space=smem, size = 0x4, offset = 0x4, fixed_abs, tag = 'smem constant byte address 0x4 - core index']
  #allocation1 [shape = 'u32[72,128]{1,0:T(1,128)}', space=vmem, size = 0x9000, scoped, tag = 'internal scratch']
  #allocation2 [shape = 'f32[1]{0:T(128)S(6)}', space=smem, size = 0x200, scoped, tag = 'scoped memory for tpu_custom_call.1']
  %s0 = inlined_call_operand.<no memory space> [shape: f32[1], index: 0, kind: input, shape index: {}]
  %s1 = inlined_call_operand.vmem [shape: f32[16,32], index: 1, kind: input, shape index: {}]
  %s2 = inlined_call_operand.vmem [shape: f32[32,128], index: 2, kind: input, shape index: {}]
  %s3 = inlined_call_operand.vmem [shape: f32[128,32], index: 3, kind: input, shape index: {}]
  %s4 = inlined_call_operand.hbm [shape: f32[16,32], index: 4, kind: output, shape index: {}]
  %s5 = sld [smem:[#allocation0]]
  $region49: #{tpu_custom_call.1} parent=0
    _
  %s7 = ssub.s32 1, %s5
  %s8 = scalar_select 0, %s7, %s5
  %9 = sst [smem:[#allocation2]] %s0
  $region1: #{tpu_custom_call.1} parent=0
    #allocation3 [shape = 'u8[8192]{0}', space=vmem, size = 0x2000, scoped, tag = 'output window, operand 0']
    #allocation4 [shape = 's32[2]{0}', space=sflag, size = 0x8, scoped, tag = 'scoped memory for tpu_custom_call.1']
    %10 = vsyncpa [#allocation4], 0
    %s11 = scalar_lea.sflag [#allocation4], 1
    %12 = vsyncpa %s11, 0
    loop: start=0, step=1, limit=4
    $region2: #{tpu_custom_call.1} parent=1 // loop_pre_header
      _
    $region3: #{tpu_custom_call.1} parent=1 // loop_header
      %s14 = sphi 0, %s18
      %p15 = scmp.ge.s32.totalorder %s14, 4
      %s22 = sphi 0, %s22
      %s24 = sphi 0, %s22
      %s25 = sphi 0, %s24
      %s39 = sphi 0, %s25
      %s45 = sphi 0, %s47
      %s48 = sphi 0, %s45
      %s49 = sphi 0, %s48
      %s65 = sphi 0, %s49
      %s69 = sphi 0, %s69
      %s71 = sphi 0, %s69
      %s72 = sphi 0, %s71
      %s86 = sphi 0, %s72
      %s90 = sphi 0, %s90
      %s92 = sphi 0, %s90
      %s93 = sphi 0, %s92
      %s107 = sphi 0, %s93
      %s113 = sphi 0, %s115
      %s116 = sphi 0, %s113
      %s117 = sphi 0, %s116
      %s133 = sphi 0, %s117
    $region4: #{tpu_custom_call.1} parent=1 // loop_header_branch
      %17 = sbr.rel (%p15) target = $region8
    $region5: #{tpu_custom_call.1} parent=1 // loop_body
      %s19 = ssub.s32 %s14, 1
      %s20 = ssub.s32 %s14, 2
      %s21 = sadd.s32 %s14, 1
      %s23 = sadd.s32 %s22, 1
      %p26 = scmp.eq.s32.totalorder %s14, 1
      %p27 = scmp.ne.s32.totalorder %s22, %s24
      %p28 = scmp.eq.s32.totalorder %s14, 0
      %p29 = por %p27, %p28
      %p30 = scmp.ne.s32.totalorder %s22, %s24
      %p31 = scmp.eq.s32.totalorder %s19, 1
      %p32 = por %p30, %p31
      %p33 = scmp.ne.s32.totalorder %s24, %s25
      %p34 = scmp.eq.s32.totalorder %s19, 0
      %p35 = por %p33, %p34
      %p36 = scmp.ne.s32.totalorder %s24, %s25
      %p37 = scmp.eq.s32.totalorder %s20, 1
      %p38 = por %p36, %p37
      %p40 = scmp.ne.s32.totalorder %s25, %s39
      %p41 = scmp.eq.s32.totalorder %s20, 0
      %p42 = por %p40, %p41
      %s43 = ssub.s32 %s14, %s21
      %p44 = scmp.eq.s32.totalorder %s43, 0
      %s46 = sadd.s32 %s45, 1
      %s47 = scalar_select %p44, %s45, %s46
      %p50 = pneg %p44
      %p51 = scmp.eq.s32.totalorder %s14, 1
      %p52 = por %p50, %p51
      %p53 = scmp.ne.s32.totalorder %s45, %s48
      %p54 = scmp.eq.s32.totalorder %s14, 0
      %p55 = por %p53, %p54
      %p56 = scmp.ne.s32.totalorder %s45, %s48
      %p57 = scmp.eq.s32.totalorder %s19, 1
      %p58 = por %p56, %p57
      %p59 = scmp.ne.s32.totalorder %s48, %s49
      %p60 = scmp.eq.s32.totalorder %s19, 0
      %p61 = por %p59, %p60
      %p62 = scmp.ne.s32.totalorder %s48, %s49
      %p63 = scmp.eq.s32.totalorder %s20, 1
      %p64 = por %p62, %p63
      %p66 = scmp.ne.s32.totalorder %s49, %s65
      %p67 = scmp.eq.s32.totalorder %s20, 0
      %p68 = por %p66, %p67
      %s70 = sadd.s32 %s69, 1
      %p73 = scmp.eq.s32.totalorder %s14, 1
      %p74 = scmp.ne.s32.totalorder %s69, %s71
      %p75 = scmp.eq.s32.totalorder %s14, 0
      %p76 = por %p74, %p75
      %p77 = scmp.ne.s32.totalorder %s69, %s71
      %p78 = scmp.eq.s32.totalorder %s19, 1
      %p79 = por %p77, %p78
      %p80 = scmp.ne.s32.totalorder %s71, %s72
      %p81 = scmp.eq.s32.totalorder %s19, 0
      %p82 = por %p80, %p81
      %p83 = scmp.ne.s32.totalorder %s71, %s72
      %p84 = scmp.eq.s32.totalorder %s20, 1
      %p85 = por %p83, %p84
      %p87 = scmp.ne.s32.totalorder %s72, %s86
      %p88 = scmp.eq.s32.totalorder %s20, 0
      %p89 = por %p87, %p88
      %s91 = sadd.s32 %s90, 1
      %p94 = scmp.eq.s32.totalorder %s14, 1
      %p95 = scmp.ne.s32.totalorder %s90, %s92
      %p96 = scmp.eq.s32.totalorder %s14, 0
      %p97 = por %p95, %p96
      %p98 = scmp.ne.s32.totalorder %s90, %s92
      %p99 = scmp.eq.s32.totalorder %s19, 1
      %p100 = por %p98, %p99
      %p101 = scmp.ne.s32.totalorder %s92, %s93
      %p102 = scmp.eq.s32.totalorder %s19, 0
      %p103 = por %p101, %p102
      %p104 = scmp.ne.s32.totalorder %s92, %s93
      %p105 = scmp.eq.s32.totalorder %s20, 1
      %p106 = por %p104, %p105
      %p108 = scmp.ne.s32.totalorder %s93, %s107
      %p109 = scmp.eq.s32.totalorder %s20, 0
      %p110 = por %p108, %p109
      %s111 = ssub.s32 %s14, %s21
      %p112 = scmp.eq.s32.totalorder %s111, 0
      %s114 = sadd.s32 %s113, 1
      %s115 = scalar_select %p112, %s113, %s114
      %p118 = pneg %p112
      %p119 = scmp.eq.s32.totalorder %s14, 1
      %p120 = por %p118, %p119
      %p121 = scmp.ne.s32.totalorder %s113, %s116
      %p122 = scmp.eq.s32.totalorder %s14, 0
      %p123 = por %p121, %p122
      %p124 = scmp.ne.s32.totalorder %s113, %s116
      %p125 = scmp.eq.s32.totalorder %s19, 1
      %p126 = por %p124, %p125
      %p127 = scmp.ne.s32.totalorder %s116, %s117
      %p128 = scmp.eq.s32.totalorder %s19, 0
      %p129 = por %p127, %p128
      %p130 = scmp.ne.s32.totalorder %s116, %s117
      %p131 = scmp.eq.s32.totalorder %s20, 1
      %p132 = por %p130, %p131
      %p134 = scmp.ne.s32.totalorder %s117, %s133
      %p135 = scmp.eq.s32.totalorder %s20, 0
      %p136 = por %p134, %p135
      %p137 = scmp.le.s32.totalorder 1, %s14
      %p138 = scmp.lt.s32.totalorder %s14, 3
      %p139 = pnand %p137, %p138
      %p140 = pneg %p139
      // Predicated region
      $region9: #{tpu_custom_call.1} parent=5 // pred_check
        _
      $region10: #{tpu_custom_call.1} parent=5 // pred_check_branch
        %142 = sbr.rel (%p139) target = $region12
      $region11: #{tpu_custom_call.1} parent=5 // pred_region
        %s143 = ssub.s32 %s14, 1
        // Predicated region
        $region13: #{tpu_custom_call.1} parent=11 // pred_check
          %p144 = pneg %p35
        $region14: #{tpu_custom_call.1} parent=11 // pred_check_branch
          %146 = sbr.rel (%p144) target = $region16
        $region15: #{tpu_custom_call.1} parent=11 // pred_region
          _
        $region16: #{tpu_custom_call.1} parent=11 // pred_fallthru
          _
        // Predicated region
        $region17: #{tpu_custom_call.1} parent=11 // pred_check
          %p147 = pneg %p82
        $region18: #{tpu_custom_call.1} parent=11 // pred_check_branch
          %149 = sbr.rel (%p147) target = $region20
        $region19: #{tpu_custom_call.1} parent=11 // pred_region
          _
        $region20: #{tpu_custom_call.1} parent=11 // pred_fallthru
          _
        // Predicated region
        $region21: #{tpu_custom_call.1} parent=11 // pred_check
          %p150 = pneg %p103
        $region22: #{tpu_custom_call.1} parent=11 // pred_check_branch
          %152 = sbr.rel (%p150) target = $region24
        $region23: #{tpu_custom_call.1} parent=11 // pred_region
          _
        $region24: #{tpu_custom_call.1} parent=11 // pred_fallthru
          _
      $region12: #{tpu_custom_call.1} parent=5 // pred_fallthru
        _
      %p153 = scmp.lt.s32.totalorder %s14, 2
      // Predicated region
      $region25: #{tpu_custom_call.1} parent=5 // pred_check
        %p154 = pneg %p153
      $region26: #{tpu_custom_call.1} parent=5 // pred_check_branch
        %156 = sbr.rel (%p154) target = $region28
      $region27: #{tpu_custom_call.1} parent=5 // pred_region
        // Predicated region
        $region29: #{tpu_custom_call.1} parent=27 // pred_check
          %p157 = pneg %p55
        $region30: #{tpu_custom_call.1} parent=27 // pred_check_branch
          %159 = sbr.rel (%p157) target = $region32
        $region31: #{tpu_custom_call.1} parent=27 // pred_region
          %p160 = scmp.lt.s32.totalorder %s14, 1
          %s161 = scalar_select %p160, %s14, 1
          %s162 = smul.addr %s161, 8
          %s163 = scalar_lea.vmem %s1, %s162
        $region32: #{tpu_custom_call.1} parent=27 // pred_fallthru
          _
      $region28: #{tpu_custom_call.1} parent=5 // pred_fallthru
        _
      %p164 = scmp.le.s32.totalorder 1, %s14
      %p165 = scmp.lt.s32.totalorder %s14, 3
      %p166 = pnand %p164, %p165
      %p167 = pneg %p166
      // Predicated region
      $region33: #{tpu_custom_call.1} parent=5 // pred_check
        _
      $region34: #{tpu_custom_call.1} parent=5 // pred_check_branch
        %169 = sbr.rel (%p166) target = $region36
      $region35: #{tpu_custom_call.1} parent=5 // pred_region
        %s170 = ssub.s32 %s14, 1
        %p171 = pneg %p35
        %p172 = pneg %p32
        %p173 = scmp.lt.s32.totalorder %s19, 1
        %s174 = scalar_select %p173, %s19, 1
        %s175 = smul.addr %s174, 8
        %s176 = scalar_lea.vmem %s1, %s175
        %p177 = pneg %p61
        %p178 = pneg %p58
        %p179 = pneg %p82
        %p180 = pneg %p79
        %p181 = pneg %p103
        %p182 = pneg %p100
        %p183 = pneg %p129
        %p184 = pneg %p126
        %s185 = sand.u32 %s116, 1
        %s186 = scalar_lea.sflag [#allocation4], %s185
        %s187 = sand.u32 %s116, 1
        %s188 = smul.addr %s187, 8
        %s189 = scalar_lea.vmem [#allocation3], %s188
        %p190 = scmp.lt.s32.totalorder %s19, 1
        %s191 = scalar_select %p190, %s19, 1
        %s192 = smul.addr %s191, 8
        %s193 = scalar_lea.vmem %s1, %s192
        %v194 = vld [vmem:[%s193] sm:$0xff]
        %v195 = vld [vmem:[%s2] sm:$0xff]
        %v196 = vld [vmem:[%s2 + $0x8] sm:$0xff]
        %v197 = vld [vmem:[%s2 + $0x10] sm:$0xff]
        %v198 = vld [vmem:[%s2 + $0x18] sm:$0xff]
        %vm199 = vcmask 261120
        %v201 = vsel %vm199, %v194, 0
        %203 = vmatpush.msra.mxu0 0.0
        %204 = vmatpush.msra.mxu0 0.0
        %205 = vmatpush.msra.mxu0 0.0
        %206 = vmatpush.msra.mxu0 0.0
        %207 = vmatpush.msra.mxu0 0.0
        %208 = vmatpush.msra.mxu0 0.0
        %209 = vmatpush.msra.mxu0 0.0
        %210 = vmatpush.msra.mxu0 0.0
        %211 = vmatpush.msra.mxu0 0.0
        %212 = vmatpush.msra.mxu0 0.0
        %213 = vmatpush.msra.mxu0 0.0
        %214 = vmatpush.msra.mxu0 0.0
        %215 = vmatpush.msra.mxu0 %v198
        %216 = vmatpush.msra.mxu0 %v197
        %217 = vmatpush.msra.mxu0 %v196
        %218 = vmatpush.msra.mxu0 %v195
        %219 = vmatmul.f32.gmra.mxu0 %v201
        %v220 = vpop.f32.mrf.mxu0
        %v221 = vadd.f32 0.0, %v220
        %222 = vdwg.mxu0
        %s223 = sld [smem:[#allocation2]]
        %v224 = vstv %s223
        %v225 = vmul.f32 %v224, %v221
        %v226 = vld [vmem:[%s3] sm:$0xff]
        %v227 = vld [vmem:[%s3 + $0x8] sm:$0xff]
        %v228 = vld [vmem:[%s3 + $0x10] sm:$0xff]
        %v229 = vld [vmem:[%s3 + $0x18] sm:$0xff]
        %v230 = vld [vmem:[%s3 + $0x20] sm:$0xff]
        %v231 = vld [vmem:[%s3 + $0x28] sm:$0xff]
        %v232 = vld [vmem:[%s3 + $0x30] sm:$0xff]
        %v233 = vld [vmem:[%s3 + $0x38] sm:$0xff]
        %v234 = vld [vmem:[%s3 + $0x40] sm:$0xff]
        %v235 = vld [vmem:[%s3 + $0x48] sm:$0xff]
        %v236 = vld [vmem:[%s3 + $0x50] sm:$0xff]
        %v237 = vld [vmem:[%s3 + $0x58] sm:$0xff]
        %v238 = vld [vmem:[%s3 + $0x60] sm:$0xff]
        %v239 = vld [vmem:[%s3 + $0x68] sm:$0xff]
        %v240 = vld [vmem:[%s3 + $0x70] sm:$0xff]
        %v241 = vld [vmem:[%s3 + $0x78] sm:$0xff]
        %242 = vmatpush.msra.mxu0 %v241
        %243 = vmatpush.msra.mxu0 %v240
        %244 = vmatpush.msra.mxu0 %v239
        %245 = vmatpush.msra.mxu0 %v238
        %246 = vmatpush.msra.mxu0 %v237
        %247 = vmatpush.msra.mxu0 %v236
        %248 = vmatpush.msra.mxu0 %v235
        %249 = vmatpush.msra.mxu0 %v234
        %250 = vmatpush.msra.mxu0 %v233
        %251 = vmatpush.msra.mxu0 %v232
        %252 = vmatpush.msra.mxu0 %v231
        %253 = vmatpush.msra.mxu0 %v230
        %254 = vmatpush.msra.mxu0 %v229
        %255 = vmatpush.msra.mxu0 %v228
        %256 = vmatpush.msra.mxu0 %v227
        %257 = vmatpush.msra.mxu0 %v226
        %258 = vmatmul.f32.gmra.mxu0 %v225
        %v259 = vpop.f32.mrf.mxu0
        %v260 = vadd.f32 0.0, %v259
        %261 = vdwg.mxu0
        %262 = vst.msk [vmem:[%s189] sm:$0xff] %vm199, %v260
        %s263 = sand.u32 %s116, 1
        %s264 = scalar_lea.sflag [#allocation4], %s263
        %s265 = sand.u32 %s116, 1
        %s266 = smul.addr %s265, 8
        %s267 = scalar_lea.vmem [#allocation3], %s266
        // Predicated region
        $region37: #{tpu_custom_call.1} parent=35 // pred_check
          %p268 = pneg %p126
        $region38: #{tpu_custom_call.1} parent=35 // pred_check_branch
          %270 = sbr.rel (%p268) target = $region40
        $region39: #{tpu_custom_call.1} parent=35 // pred_region
          %272 = vsyncadd %s264, 0
          %s273 = smul.addr %s19, 8
          %s274 = scalar_lea.hbm %s4, %s273
          %s276 = sshll.u32 %s267, 4
          %s277 = int_to_ptr.vmem [resolvable:$true] %s276
          %s278 = sshll.u32 %s274, 4
          %s279 = int_to_ptr.hbm [resolvable:$true] %s278
          %281 = dma.vmem_to_hbm [thread:$0]  %s277, 128, %s279, %s264
        $region40: #{tpu_custom_call.1} parent=35 // pred_fallthru
          _
      $region36: #{tpu_custom_call.1} parent=5 // pred_fallthru
        _
      %p282 = scmp.le.s32.totalorder 2, %s14
      // Predicated region
      $region41: #{tpu_custom_call.1} parent=5 // pred_check
        %p283 = pneg %p282
      $region42: #{tpu_custom_call.1} parent=5 // pred_check_branch
        %285 = sbr.rel (%p283) target = $region44
      $region43: #{tpu_custom_call.1} parent=5 // pred_region
        %s286 = ssub.s32 %s14, 2
        // Predicated region
        $region45: #{tpu_custom_call.1} parent=43 // pred_check
          %p287 = pneg %p132
        $region46: #{tpu_custom_call.1} parent=43 // pred_check_branch
          %289 = sbr.rel (%p287) target = $region48
        $region47: #{tpu_custom_call.1} parent=43 // pred_region
          %s290 = sand.u32 %s117, 1
          %s291 = scalar_lea.sflag [#allocation4], %s290
          %s292 = sand.u32 %s117, 1
          %s293 = smul.addr %s292, 8
          %s294 = scalar_lea.vmem [#allocation3], %s293
          %296 = dma.done %s291, 128
        $region48: #{tpu_custom_call.1} parent=43 // pred_fallthru
          _
      $region44: #{tpu_custom_call.1} parent=5 // pred_fallthru
        _
    $region6: #{tpu_custom_call.1} parent=1 // loop_footer
      %s18 = sadd.s32 1, %s14
    $region7: #{tpu_custom_call.1} parent=1 // loop_footer_branch
      %13 = sbr.rel target = $region3
    $region8: #{tpu_custom_call.1} parent=1 // loop_exit
      _
    %297 = vsyncpa [#allocation4], 1
    %s298 = scalar_lea.sflag [#allocation4], 1
    %299 = vsyncpa %s298, 1

</llo_original>
